<compile_context>
chip_gen: v5e
topology: v5e:2x2
jax: 0.10.0
libtpu: 0.0.40
codegen_flags: <defaults>
</compile_context>

<pallas_src>
import functools

import jax
import jax.numpy as jnp
from jax import lax
from jax.experimental import pallas as pl
from jax.experimental.pallas import tpu as pltpu


def _round_up(x, m):
    return ((x + m - 1) // m) * m


# -----------------------------------------------------------------------------
# Fused Pallas kernel: out = relu(conv3x3_bn(x)) @ w2   (per batch x row tile)
# -----------------------------------------------------------------------------
def _bisenet_head_kernel(x_ref, w1_ref, b1_ref, w2_ref, o_ref):
    """One (batch, row-tile) step of the fused BiSeNetOutput head.

    x_ref : (1, H+2, W+2, Cin)  bf16  full zero-padded image of this batch elem
                                      (resident across the row-tile grid axis)
    w1_ref: (3, 3*Cin, Cmid)    bf16  3x3 conv weights, BN scale folded in,
                                      dx taps merged along the K axis
    b1_ref: (1, Cmid)           f32   folded BN bias
    w2_ref: (Cmid, Cpad)        bf16  1x1 classifier weights (lane padded)
    o_ref : (1, TH, W, Cpad)    bf16
    """
    th, wo, cpad = o_ref.shape[1], o_ref.shape[2], o_ref.shape[3]
    cin = x_ref.shape[3]

    t = pl.program_id(1)
    row0 = pl.multiple_of(t * th, th)

    # (TH+2)-row halo window of this tile, sliced from the resident VMEM block.
    xw = x_ref[0, pl.ds(row0, th + 2), :, :]          # (TH+2, W+2, Cin) bf16

    # Merge the 3 dx taps along channels -> contraction depth 3*Cin per dot.
    def patch(dy):
        p = jnp.concatenate(
            [xw[dy:dy + th, dx:dx + wo, :] for dx in range(3)], axis=-1)
        return p.reshape(th * wo, 3 * cin)            # aligned leading-dim merge

    p0, p1, p2 = patch(0), patch(1), patch(2)

    # Uninterrupted accumulating MXU chain (f32 accumulation on the MXU).
    acc = jnp.dot(p0, w1_ref[0], preferred_element_type=jnp.float32)
    acc = acc + jnp.dot(p1, w1_ref[1], preferred_element_type=jnp.float32)
    acc = acc + jnp.dot(p2, w1_ref[2], preferred_element_type=jnp.float32)

    # BN bias + ReLU epilogue, then the fused 1x1 classifier conv.
    mid = jnp.maximum(acc + b1_ref[...], 0.0).astype(jnp.bfloat16)
    out = jnp.dot(mid, w2_ref[...], preferred_element_type=jnp.float32)
    o_ref[...] = out.reshape(1, th, wo, cpad).astype(o_ref.dtype)


# -----------------------------------------------------------------------------
# Wrapper helpers
# -----------------------------------------------------------------------------
def _vmem_limit_bytes():
    """Generation-aware scoped-VMEM limit (enforced via CompilerParams)."""
    phys = None
    try:
        info = pltpu.get_tpu_info()
        phys = getattr(info, "vmem_capacity_bytes", None)
    except Exception:
        phys = None
    if not phys:
        phys = 64 * 1024 * 1024                       # conservative (v7x-sized)
    # ~3/4 of physical: ~96 MiB on 128 MiB parts (v5e/v6e), ~48 MiB on v7x.
    return min(int(phys * 3 // 4), 96 * 1024 * 1024)


def _pick_row_tile(N, H, W, min_total_steps=8, max_acc_rows=128):
    """Largest divisor TH of H such that (a) flattened spatial rows per step
    stay <= max_acc_rows (bounds the live f32 accumulator / vreg pressure) and
    (b) there are enough grid steps for every TensorCore to pipeline."""
    best = 1
    for th in range(1, H + 1):
        if H % th:
            continue
        if th * W <= max_acc_rows and N * (H // th) >= min_total_steps:
            best = th
    if best == 1:
        # Tiny problems: relax the step-count constraint.
        for th in range(1, H + 1):
            if H % th == 0 and th * W <= max_acc_rows:
                best = th
    return best


def _estimate_vmem_bytes(H, W, cin, cmid, cpad, th):
    """Working-set estimate incl. double-buffered I/O blocks and temporaries."""
    in_blk = (H + 2) * (W + 2) * cin * 2 * 2          # bf16 image block x2 bufs
    out_blk = th * W * cpad * 2 * 2                   # bf16 output tile x2 bufs
    weights = (9 * cin * cmid * 2 + cmid * 4 + cmid * cpad * 2) * 2
    rows = th * W
    tmps = rows * (3 * 3 * cin * 2                    # three merged-K patches
                   + cmid * 4 * 2                     # acc + epilogue
                   + cpad * 4)                        # pre-cast 1x1 result
    return in_blk + out_blk + weights + tmps


# -----------------------------------------------------------------------------
# Wrapper
# -----------------------------------------------------------------------------
def bisenet_output_forward(w1, b1, w2, n_classes, x_nchw):
    """BiSeNetOutput.forward.  x_nchw: [N, Cin, H, W] f32 -> [N, n_classes, H, W] f32."""
    N, cin, H, W = x_nchw.shape
    cmid = w1.shape[2]
    cpad = w2.shape[1]

    x = jnp.transpose(x_nchw, (0, 2, 3, 1)).astype(jnp.bfloat16)   # NCHW -> NHWC, bf16
    xp = jnp.pad(x, ((0, 0), (1, 1), (1, 1), (0, 0)))              # zero pad=1

    th = _pick_row_tile(N, H, W)
    T = H // th

    vmem_limit = _vmem_limit_bytes()
    need = _estimate_vmem_bytes(H, W, cin, cmid, cpad, th)
    # TODO(synk): for feature maps too large to keep the whole padded image in
    # VMEM, switch the input to memory_space=pl.ANY + manual halo-slab DMA.
    assert need <= vmem_limit, (need, vmem_limit)

    flops = 2 * N * H * W * cmid * (9 * cin + cpad)
    bytes_accessed = (xp.size * 2 + w1.size * 2 + b1.size * 4 + w2.size * 2
                      + N * H * W * cpad * 2)

    out = pl.pallas_call(
        _bisenet_head_kernel,
        out_shape=jax.ShapeDtypeStruct((N, H, W, cpad), jnp.bfloat16),
        grid=(N, T),
        in_specs=[
            # Full padded image per batch element; index does not depend on the
            # row-tile axis -> DMA'd once per batch element, reused across t.
            pl.BlockSpec((1, H + 2, W + 2, cin), lambda n, t: (n, 0, 0, 0)),
            pl.BlockSpec((3, 3 * cin, cmid), lambda n, t: (0, 0, 0)),
            pl.BlockSpec((1, cmid), lambda n, t: (0, 0)),
            pl.BlockSpec((cmid, cpad), lambda n, t: (0, 0)),
        ],
        out_specs=pl.BlockSpec((1, th, W, cpad), lambda n, t: (n, t, 0, 0)),
        compiler_params=pltpu.CompilerParams(
            dimension_semantics=("parallel", "parallel"),
            vmem_limit_bytes=vmem_limit),
        cost_estimate=pl.CostEstimate(flops=flops, transcendentals=0,
                                      bytes_accessed=bytes_accessed),
    )(xp, w1, b1, w2)

    out = out[..., :n_classes].astype(jnp.float32)
    return jnp.transpose(out, (0, 3, 1, 2))                        # NHWC -> NCHW


# -----------------------------------------------------------------------------
# Deterministic parameters (PyTorch-equivalent init) + one-time fold/cast
# -----------------------------------------------------------------------------
def make_params(key, in_chan, mid_chan, n_classes):
    """kaiming_normal_(a=1) convs (bias=False) + eval-mode BatchNorm."""
    k1, k2, kg, kb = jax.random.split(key, 4)
    w1 = jax.random.normal(k1, (3, 3, in_chan, mid_chan), jnp.float32) \
        * (1.0 / (9 * in_chan)) ** 0.5
    w2 = jax.random.normal(k2, (1, 1, mid_chan, n_classes), jnp.float32) \
        * (1.0 / mid_chan) ** 0.5
    eps = 1e-5
    gamma = 1.0 + 0.1 * jax.random.normal(kg, (mid_chan,), jnp.float32)
    beta = 0.1 * jax.random.normal(kb, (mid_chan,), jnp.float32)
    # BN eval mode with PyTorch-default running stats (mean=0, var=1):
    scale = gamma / jnp.sqrt(1.0 + eps)
    bias = beta  # beta - running_mean * scale, running_mean == 0
    return dict(w1=w1, w2=w2, bn_scale=scale, bn_bias=bias)


def prepare_params(raw):
    """One-time transform: fold BN scale into conv1, merge dx taps along K,
    cast bf16, lane-pad the classifier output channels to a multiple of 128."""
    w1 = raw["w1"] * raw["bn_scale"][None, None, None, :]
    kh, kw, cin, cmid = w1.shape
    w1 = w1.reshape(kh, kw * cin, cmid).astype(jnp.bfloat16)   # (3, 3*Cin, Cmid)
    b1 = raw["bn_bias"].reshape(1, cmid).astype(jnp.float32)
    w2 = raw["w2"].reshape(cmid, -1)
    n_classes = w2.shape[1]
    cpad = max(128, _round_up(n_classes, 128))
    w2 = jnp.pad(w2, ((0, 0), (0, cpad - n_classes))).astype(jnp.bfloat16)
    return w1, b1, w2


# -----------------------------------------------------------------------------
# Pure-JAX reference (same bf16 casting) for correctness check
# -----------------------------------------------------------------------------
def reference_forward(raw, x_nchw):
    x = x_nchw.astype(jnp.bfloat16)
    w1 = (raw["w1"] * raw["bn_scale"][None, None, None, :]).astype(jnp.bfloat16)
    y = lax.conv_general_dilated(
        x, w1, window_strides=(1, 1), padding="SAME",
        dimension_numbers=("NCHW", "HWIO", "NCHW"),
        preferred_element_type=jnp.float32)
    y = jnp.maximum(y + raw["bn_bias"][None, :, None, None], 0.0).astype(jnp.bfloat16)
    w2 = raw["w2"].astype(jnp.bfloat16)
    return lax.conv_general_dilated(
        y, w2, window_strides=(1, 1), padding="VALID",
        dimension_numbers=("NCHW", "HWIO", "NCHW"),
        preferred_element_type=jnp.float32)


# -----------------------------------------------------------------------------
# Main
# -----------------------------------------------------------------------------
if __name__ == "__main__":
    in_chan, mid_chan, n_classes = 64, 128, 19
    N, H, W = 2, 16, 16

    root = jax.random.PRNGKey(0)
    k_params, k_x = jax.random.split(root)
    raw = make_params(k_params, in_chan, mid_chan, n_classes)
    x = jax.random.normal(k_x, (N, in_chan, H, W), jnp.float32)   # NCHW like PyTorch

    w1, b1, w2 = prepare_params(raw)
    fwd = jax.jit(functools.partial(bisenet_output_forward, w1, b1, w2, n_classes))
    out = fwd(x)
    jax.block_until_ready(out)

    ref = jax.jit(functools.partial(reference_forward, raw))(x)
    jax.block_until_ready(ref)

    assert out.shape == (N, n_classes, H, W), out.shape
    assert bool(jnp.all(jnp.isfinite(out)))
    assert bool(jnp.allclose(out, ref, atol=3e-2, rtol=3e-2)), \
        float(jnp.max(jnp.abs(out - ref)))
    print("KERNEL_OK")
</pallas_src>

<mosaic_0001>
module attributes {stable_mosaic.version = 11 : i64} {
  func.func @_bisenet_head_kernel(%arg0: i32, %arg1: i32, %arg2: memref<1x18x18x64xbf16, #tpu.memory_space<vmem>>, %arg3: memref<3x192x128xbf16, #tpu.memory_space<vmem>>, %arg4: memref<1x128xf32, #tpu.memory_space<vmem>>, %arg5: memref<128x128xbf16, #tpu.memory_space<vmem>>, %arg6: memref<1x4x16x128xbf16, #tpu.memory_space<vmem>>) attributes {dimension_semantics = [#tpu.dimension_semantics<parallel>, #tpu.dimension_semantics<parallel>], iteration_bounds = array<i64: 2, 4>, scalar_prefetch = 0 : i64, scratch_operands = 0 : i64, tpu.core_type = #tpu.core_type<tc>, window_params = [{transform_indices = @transform_0, window_bounds = array<i64: 1, 18, 18, 64>}, {pipeline_mode = #tpu.pipeline_mode<synchronous>, transform_indices = @transform_1, window_bounds = array<i64: 3, 192, 128>}, {pipeline_mode = #tpu.pipeline_mode<synchronous>, transform_indices = @transform_2, window_bounds = array<i64: 1, 128>}, {pipeline_mode = #tpu.pipeline_mode<synchronous>, transform_indices = @transform_3, window_bounds = array<i64: 128, 128>}, {transform_indices = @transform_4, window_bounds = array<i64: 1, 4, 16, 128>}]} {
    %c4_i32 = arith.constant 4 : i32
    %0 = arith.muli %arg1, %c4_i32 : i32
    %1 = tpu.assume_multiple %0, 4 : i32
    %c0 = arith.constant 0 : index
    %2 = arith.index_cast %1 : i32 to index
    %c0_0 = arith.constant 0 : index
    %c0_1 = arith.constant 0 : index
    %3 = vector.load %arg2[%c0, %2, %c0_0, %c0_1] : memref<1x18x18x64xbf16, #tpu.memory_space<vmem>>, vector<1x6x18x64xbf16>
    %4 = vector.shape_cast %3 : vector<1x6x18x64xbf16> to vector<6x18x64xbf16>
    %5 = vector.extract_strided_slice %4 {offsets = [0, 0, 0], sizes = [4, 16, 64], strides = [1, 1, 1]} : vector<6x18x64xbf16> to vector<4x16x64xbf16>
    %6 = vector.extract_strided_slice %4 {offsets = [0, 1, 0], sizes = [4, 16, 64], strides = [1, 1, 1]} : vector<6x18x64xbf16> to vector<4x16x64xbf16>
    %7 = vector.extract_strided_slice %4 {offsets = [0, 2, 0], sizes = [4, 16, 64], strides = [1, 1, 1]} : vector<6x18x64xbf16> to vector<4x16x64xbf16>
    %8 = tpu.concatenate %5, %6, %7 in 2 : vector<4x16x64xbf16>, vector<4x16x64xbf16>, vector<4x16x64xbf16> -> vector<4x16x192xbf16>
    %9 = vector.shape_cast %8 : vector<4x16x192xbf16> to vector<64x192xbf16>
    %10 = vector.extract_strided_slice %4 {offsets = [1, 0, 0], sizes = [4, 16, 64], strides = [1, 1, 1]} : vector<6x18x64xbf16> to vector<4x16x64xbf16>
    %11 = vector.extract_strided_slice %4 {offsets = [1, 1, 0], sizes = [4, 16, 64], strides = [1, 1, 1]} : vector<6x18x64xbf16> to vector<4x16x64xbf16>
    %12 = vector.extract_strided_slice %4 {offsets = [1, 2, 0], sizes = [4, 16, 64], strides = [1, 1, 1]} : vector<6x18x64xbf16> to vector<4x16x64xbf16>
    %13 = tpu.concatenate %10, %11, %12 in 2 : vector<4x16x64xbf16>, vector<4x16x64xbf16>, vector<4x16x64xbf16> -> vector<4x16x192xbf16>
    %14 = vector.shape_cast %13 : vector<4x16x192xbf16> to vector<64x192xbf16>
    %15 = vector.extract_strided_slice %4 {offsets = [2, 0, 0], sizes = [4, 16, 64], strides = [1, 1, 1]} : vector<6x18x64xbf16> to vector<4x16x64xbf16>
    %16 = vector.extract_strided_slice %4 {offsets = [2, 1, 0], sizes = [4, 16, 64], strides = [1, 1, 1]} : vector<6x18x64xbf16> to vector<4x16x64xbf16>
    %17 = vector.extract_strided_slice %4 {offsets = [2, 2, 0], sizes = [4, 16, 64], strides = [1, 1, 1]} : vector<6x18x64xbf16> to vector<4x16x64xbf16>
    %18 = tpu.concatenate %15, %16, %17 in 2 : vector<4x16x64xbf16>, vector<4x16x64xbf16>, vector<4x16x64xbf16> -> vector<4x16x192xbf16>
    %19 = vector.shape_cast %18 : vector<4x16x192xbf16> to vector<64x192xbf16>
    %c0_2 = arith.constant 0 : index
    %c0_3 = arith.constant 0 : index
    %c0_4 = arith.constant 0 : index
    %20 = vector.load %arg3[%c0_2, %c0_3, %c0_4] : memref<3x192x128xbf16, #tpu.memory_space<vmem>>, vector<1x192x128xbf16>
    %21 = vector.shape_cast %20 : vector<1x192x128xbf16> to vector<192x128xbf16>
    %cst = arith.constant dense<0.000000e+00> : vector<64x128xf32>
    %22 = tpu.matmul %9, %21, %cst {dimension_numbers = #tpu.dot_dimension_numbers<[1], [0], [0], [1], [0, 0, 1, 1], [], []>} : vector<64x192xbf16>, vector<192x128xbf16>, vector<64x128xf32> -> vector<64x128xf32>
    %c1 = arith.constant 1 : index
    %c0_5 = arith.constant 0 : index
    %c0_6 = arith.constant 0 : index
    %23 = vector.load %arg3[%c1, %c0_5, %c0_6] : memref<3x192x128xbf16, #tpu.memory_space<vmem>>, vector<1x192x128xbf16>
    %24 = vector.shape_cast %23 : vector<1x192x128xbf16> to vector<192x128xbf16>
    %cst_7 = arith.constant dense<0.000000e+00> : vector<64x128xf32>
    %25 = tpu.matmul %14, %24, %cst_7 {dimension_numbers = #tpu.dot_dimension_numbers<[1], [0], [0], [1], [0, 0, 1, 1], [], []>} : vector<64x192xbf16>, vector<192x128xbf16>, vector<64x128xf32> -> vector<64x128xf32>
    %26 = arith.addf %22, %25 : vector<64x128xf32>
    %c2 = arith.constant 2 : index
    %c0_8 = arith.constant 0 : index
    %c0_9 = arith.constant 0 : index
    %27 = vector.load %arg3[%c2, %c0_8, %c0_9] : memref<3x192x128xbf16, #tpu.memory_space<vmem>>, vector<1x192x128xbf16>
    %28 = vector.shape_cast %27 : vector<1x192x128xbf16> to vector<192x128xbf16>
    %cst_10 = arith.constant dense<0.000000e+00> : vector<64x128xf32>
    %29 = tpu.matmul %19, %28, %cst_10 {dimension_numbers = #tpu.dot_dimension_numbers<[1], [0], [0], [1], [0, 0, 1, 1], [], []>} : vector<64x192xbf16>, vector<192x128xbf16>, vector<64x128xf32> -> vector<64x128xf32>
    %30 = arith.addf %26, %29 : vector<64x128xf32>
    %c0_11 = arith.constant 0 : index
    %c0_12 = arith.constant 0 : index
    %31 = vector.load %arg4[%c0_11, %c0_12] : memref<1x128xf32, #tpu.memory_space<vmem>>, vector<1x128xf32>
    %32 = vector.broadcast %31 : vector<1x128xf32> to vector<64x128xf32>
    %33 = arith.addf %30, %32 : vector<64x128xf32>
    %cst_13 = arith.constant 0.000000e+00 : f32
    %34 = vector.broadcast %cst_13 : f32 to vector<64x128xf32>
    %35 = arith.maximumf %33, %34 : vector<64x128xf32>
    %36 = arith.truncf %35 : vector<64x128xf32> to vector<64x128xbf16>
    %c0_14 = arith.constant 0 : index
    %c0_15 = arith.constant 0 : index
    %37 = vector.load %arg5[%c0_14, %c0_15] : memref<128x128xbf16, #tpu.memory_space<vmem>>, vector<128x128xbf16>
    %cst_16 = arith.constant dense<0.000000e+00> : vector<64x128xf32>
    %38 = tpu.matmul %36, %37, %cst_16 {dimension_numbers = #tpu.dot_dimension_numbers<[1], [0], [0], [1], [0, 0, 1, 1], [], []>} : vector<64x128xbf16>, vector<128x128xbf16>, vector<64x128xf32> -> vector<64x128xf32>
    %39 = vector.shape_cast %38 : vector<64x128xf32> to vector<1x4x16x128xf32>
    %40 = arith.truncf %39 : vector<1x4x16x128xf32> to vector<1x4x16x128xbf16>
    %c0_17 = arith.constant 0 : index
    %c0_18 = arith.constant 0 : index
    %c0_19 = arith.constant 0 : index
    %c0_20 = arith.constant 0 : index
    %41 = vector.load %arg6[%c0_17, %c0_18, %c0_19, %c0_20] : memref<1x4x16x128xbf16, #tpu.memory_space<vmem>>, vector<1x4x16x128xbf16>
    tpu.vector_store %arg6[%c0_17, %c0_18, %c0_19, %c0_20], %40 {strides = array<i32>} : memref<1x4x16x128xbf16, #tpu.memory_space<vmem>>, vector<1x4x16x128xbf16>,
    return
  }
  func.func @transform_0(%arg0: i32, %arg1: i32) -> (i32, i32, i32, i32) {
    %c0_i32 = arith.constant 0 : i32
    %c0_i32_0 = arith.constant 0 : i32
    %c0_i32_1 = arith.constant 0 : i32
    %c0_i32_2 = arith.constant 0 : i32
    return %arg0, %c0_i32, %c0_i32_0, %c0_i32_1 : i32, i32, i32, i32
  }
  func.func @transform_1(%arg0: i32, %arg1: i32) -> (i32, i32, i32) {
    %c0_i32 = arith.constant 0 : i32
    %c0_i32_0 = arith.constant 0 : i32
    %c0_i32_1 = arith.constant 0 : i32
    %c0_i32_2 = arith.constant 0 : i32
    return %c0_i32, %c0_i32_0, %c0_i32_1 : i32, i32, i32
  }
  func.func @transform_2(%arg0: i32, %arg1: i32) -> (i32, i32) {
    %c0_i32 = arith.constant 0 : i32
    %c0_i32_0 = arith.constant 0 : i32
    %c0_i32_1 = arith.constant 0 : i32
    return %c0_i32, %c0_i32_0 : i32, i32
  }
  func.func @transform_3(%arg0: i32, %arg1: i32) -> (i32, i32) {
    %c0_i32 = arith.constant 0 : i32
    %c0_i32_0 = arith.constant 0 : i32
    %c0_i32_1 = arith.constant 0 : i32
    return %c0_i32, %c0_i32_0 : i32, i32
  }
  func.func @transform_4(%arg0: i32, %arg1: i32) -> (i32, i32, i32, i32) {
    %c0_i32 = arith.constant 0 : i32
    %c0_i32_0 = arith.constant 0 : i32
    %c0_i32_1 = arith.constant 0 : i32
    return %arg0, %arg1, %c0_i32, %c0_i32_0 : i32, i32, i32, i32
  }
}

</mosaic_0001>

<llo_original>
// kernel: bisenet_output_forward.1
$region0: #{bisenet_output_forward.1}
  #allocation0 [shape = 'u32[]', space=smem, size = 0x4, offset = 0x4, fixed_abs, tag = 'smem constant byte address 0x4 - core index']
  #allocation1 [shape = 'u32[72,128]{1,0:T(1,128)}', space=vmem, size = 0x9000, scoped, tag = 'internal scratch']
  %s0 = inlined_call_operand.vmem [shape: bf16[2,18,18,64], index: 0, kind: input, shape index: {}]
  %s1 = inlined_call_operand.vmem [shape: bf16[3,192,128], index: 1, kind: input, shape index: {}]
  %s2 = inlined_call_operand.vmem [shape: f32[1,128], index: 2, kind: input, shape index: {}]
  %s3 = inlined_call_operand.vmem [shape: bf16[128,128], index: 3, kind: input, shape index: {}]
  %s4 = inlined_call_operand.vmem [shape: bf16[2,16,16,128], index: 4, kind: output, shape index: {}]
  %s5 = sld [smem:[#allocation0]]
  $region49: #{bisenet_output_forward.1} parent=0
    _
  %s7 = ssub.s32 1, %s5
  %s8 = scalar_select 0, %s7, %s5
  loop: start=0, step=1, limit=10
  $region2: #{bisenet_output_forward.1} parent=0 // loop_pre_header
    _
  $region3: #{bisenet_output_forward.1} parent=0 // loop_header
    %s10 = sphi 0, %s14
    %p11 = scmp.ge.s32.totalorder %s10, 10
    %s17 = sphi 0, %s29
    %s18 = sphi 0, %s25
    %s19 = sphi 0, %s17
    %s20 = sphi 0, %s18
    %s21 = sphi 0, %s19
    %s22 = sphi 0, %s20
    %s32 = sphi 0, %s34
    %s35 = sphi 0, %s32
    %s36 = sphi 0, %s35
    %s52 = sphi 0, %s36
    %s56 = sphi 0, %s56
    %s58 = sphi 0, %s56
    %s59 = sphi 0, %s58
    %s73 = sphi 0, %s59
    %s77 = sphi 0, %s77
    %s79 = sphi 0, %s77
    %s80 = sphi 0, %s79
    %s94 = sphi 0, %s80
    %s98 = sphi 0, %s98
    %s100 = sphi 0, %s98
    %s101 = sphi 0, %s100
    %s115 = sphi 0, %s101
    %s123 = sphi 0, %s125
    %s126 = sphi 0, %s123
    %s127 = sphi 0, %s126
    %s143 = sphi 0, %s127
  $region4: #{bisenet_output_forward.1} parent=0 // loop_header_branch
    %13 = sbr.rel (%p11) target = $region8
  $region5: #{bisenet_output_forward.1} parent=0 // loop_body
    %s15 = ssub.s32 %s10, 1
    %s16 = ssub.s32 %s10, 2
    %s23 = sadd.s32 1, %s18
    %p24 = scmp.ge.s32.totalorder %s23, 4
    %s25 = scalar_select %p24, 0, %s23
    %s26 = sadd.s32 1, %s17
    %s27 = scalar_select %p24, %s26, %s17
    %p28 = scmp.ge.s32.totalorder %s27, 2
    %s29 = scalar_select %p28, 0, %s27
    %s30 = ssub.s32 %s17, %s29
    %p31 = scmp.eq.s32.totalorder %s30, 0
    %s33 = sadd.s32 %s32, 1
    %s34 = scalar_select %p31, %s32, %s33
    %p37 = pneg %p31
    %p38 = scmp.eq.s32.totalorder %s10, 7
    %p39 = por %p37, %p38
    %p40 = scmp.ne.s32.totalorder %s32, %s35
    %p41 = scmp.eq.s32.totalorder %s10, 0
    %p42 = por %p40, %p41
    %p43 = scmp.ne.s32.totalorder %s32, %s35
    %p44 = scmp.eq.s32.totalorder %s15, 7
    %p45 = por %p43, %p44
    %p46 = scmp.ne.s32.totalorder %s35, %s36
    %p47 = scmp.eq.s32.totalorder %s15, 0
    %p48 = por %p46, %p47
    %p49 = scmp.ne.s32.totalorder %s35, %s36
    %p50 = scmp.eq.s32.totalorder %s16, 7
    %p51 = por %p49, %p50
    %p53 = scmp.ne.s32.totalorder %s36, %s52
    %p54 = scmp.eq.s32.totalorder %s16, 0
    %p55 = por %p53, %p54
    %s57 = sadd.s32 %s56, 1
    %p60 = scmp.eq.s32.totalorder %s10, 7
    %p61 = scmp.ne.s32.totalorder %s56, %s58
    %p62 = scmp.eq.s32.totalorder %s10, 0
    %p63 = por %p61, %p62
    %p64 = scmp.ne.s32.totalorder %s56, %s58
    %p65 = scmp.eq.s32.totalorder %s15, 7
    %p66 = por %p64, %p65
    %p67 = scmp.ne.s32.totalorder %s58, %s59
    %p68 = scmp.eq.s32.totalorder %s15, 0
    %p69 = por %p67, %p68
    %p70 = scmp.ne.s32.totalorder %s58, %s59
    %p71 = scmp.eq.s32.totalorder %s16, 7
    %p72 = por %p70, %p71
    %p74 = scmp.ne.s32.totalorder %s59, %s73
    %p75 = scmp.eq.s32.totalorder %s16, 0
    %p76 = por %p74, %p75
    %s78 = sadd.s32 %s77, 1
    %p81 = scmp.eq.s32.totalorder %s10, 7
    %p82 = scmp.ne.s32.totalorder %s77, %s79
    %p83 = scmp.eq.s32.totalorder %s10, 0
    %p84 = por %p82, %p83
    %p85 = scmp.ne.s32.totalorder %s77, %s79
    %p86 = scmp.eq.s32.totalorder %s15, 7
    %p87 = por %p85, %p86
    %p88 = scmp.ne.s32.totalorder %s79, %s80
    %p89 = scmp.eq.s32.totalorder %s15, 0
    %p90 = por %p88, %p89
    %p91 = scmp.ne.s32.totalorder %s79, %s80
    %p92 = scmp.eq.s32.totalorder %s16, 7
    %p93 = por %p91, %p92
    %p95 = scmp.ne.s32.totalorder %s80, %s94
    %p96 = scmp.eq.s32.totalorder %s16, 0
    %p97 = por %p95, %p96
    %s99 = sadd.s32 %s98, 1
    %p102 = scmp.eq.s32.totalorder %s10, 7
    %p103 = scmp.ne.s32.totalorder %s98, %s100
    %p104 = scmp.eq.s32.totalorder %s10, 0
    %p105 = por %p103, %p104
    %p106 = scmp.ne.s32.totalorder %s98, %s100
    %p107 = scmp.eq.s32.totalorder %s15, 7
    %p108 = por %p106, %p107
    %p109 = scmp.ne.s32.totalorder %s100, %s101
    %p110 = scmp.eq.s32.totalorder %s15, 0
    %p111 = por %p109, %p110
    %p112 = scmp.ne.s32.totalorder %s100, %s101
    %p113 = scmp.eq.s32.totalorder %s16, 7
    %p114 = por %p112, %p113
    %p116 = scmp.ne.s32.totalorder %s101, %s115
    %p117 = scmp.eq.s32.totalorder %s16, 0
    %p118 = por %p116, %p117
    %s119 = ssub.s32 %s17, %s29
    %s120 = ssub.s32 %s18, %s25
    %s121 = sor.u32 %s119, %s120
    %p122 = scmp.eq.s32.totalorder %s121, 0
    %s124 = sadd.s32 %s123, 1
    %s125 = scalar_select %p122, %s123, %s124
    %p128 = pneg %p122
    %p129 = scmp.eq.s32.totalorder %s10, 7
    %p130 = por %p128, %p129
    %p131 = scmp.ne.s32.totalorder %s123, %s126
    %p132 = scmp.eq.s32.totalorder %s10, 0
    %p133 = por %p131, %p132
    %p134 = scmp.ne.s32.totalorder %s123, %s126
    %p135 = scmp.eq.s32.totalorder %s15, 7
    %p136 = por %p134, %p135
    %p137 = scmp.ne.s32.totalorder %s126, %s127
    %p138 = scmp.eq.s32.totalorder %s15, 0
    %p139 = por %p137, %p138
    %p140 = scmp.ne.s32.totalorder %s126, %s127
    %p141 = scmp.eq.s32.totalorder %s16, 7
    %p142 = por %p140, %p141
    %p144 = scmp.ne.s32.totalorder %s127, %s143
    %p145 = scmp.eq.s32.totalorder %s16, 0
    %p146 = por %p144, %p145
    %p147 = scmp.le.s32.totalorder 1, %s10
    %p148 = scmp.lt.s32.totalorder %s10, 9
    %p149 = pnand %p147, %p148
    %p150 = pneg %p149
    // Predicated region
    $region9: #{bisenet_output_forward.1} parent=5 // pred_check
      _
    $region10: #{bisenet_output_forward.1} parent=5 // pred_check_branch
      %152 = sbr.rel (%p149) target = $region12
    $region11: #{bisenet_output_forward.1} parent=5 // pred_region
      %s153 = ssub.s32 %s10, 1
      // Predicated region
      $region13: #{bisenet_output_forward.1} parent=11 // pred_check
        %p154 = pneg %p69
      $region14: #{bisenet_output_forward.1} parent=11 // pred_check_branch
        %156 = sbr.rel (%p154) target = $region16
      $region15: #{bisenet_output_forward.1} parent=11 // pred_region
        _
      $region16: #{bisenet_output_forward.1} parent=11 // pred_fallthru
        _
      // Predicated region
      $region17: #{bisenet_output_forward.1} parent=11 // pred_check
        %p157 = pneg %p90
      $region18: #{bisenet_output_forward.1} parent=11 // pred_check_branch
        %159 = sbr.rel (%p157) target = $region20
      $region19: #{bisenet_output_forward.1} parent=11 // pred_region
        _
      $region20: #{bisenet_output_forward.1} parent=11 // pred_fallthru
        _
      // Predicated region
      $region21: #{bisenet_output_forward.1} parent=11 // pred_check
        %p160 = pneg %p111
      $region22: #{bisenet_output_forward.1} parent=11 // pred_check_branch
        %162 = sbr.rel (%p160) target = $region24
      $region23: #{bisenet_output_forward.1} parent=11 // pred_region
        _
      $region24: #{bisenet_output_forward.1} parent=11 // pred_fallthru
        _
    $region12: #{bisenet_output_forward.1} parent=5 // pred_fallthru
      _
    %p163 = scmp.lt.s32.totalorder %s10, 8
    // Predicated region
    $region25: #{bisenet_output_forward.1} parent=5 // pred_check
      %p164 = pneg %p163
    $region26: #{bisenet_output_forward.1} parent=5 // pred_check_branch
      %166 = sbr.rel (%p164) target = $region28
    $region27: #{bisenet_output_forward.1} parent=5 // pred_region
      // Predicated region
      $region29: #{bisenet_output_forward.1} parent=27 // pred_check
        %p167 = pneg %p42
      $region30: #{bisenet_output_forward.1} parent=27 // pred_check_branch
        %169 = sbr.rel (%p167) target = $region32
      $region31: #{bisenet_output_forward.1} parent=27 // pred_region
        %p170 = scmp.lt.s32.totalorder %s17, 1
        %s171 = scalar_select %p170, %s17, 1
        %s172 = smul.addr %s171, 54
        %s173 = smul.addr %s172, 4
        %s174 = scalar_lea.vmem %s0, %s173
      $region32: #{bisenet_output_forward.1} parent=27 // pred_fallthru
        _
    $region28: #{bisenet_output_forward.1} parent=5 // pred_fallthru
      _
    %p175 = scmp.le.s32.totalorder 1, %s10
    %p176 = scmp.lt.s32.totalorder %s10, 9
    %p177 = pnand %p175, %p176
    %p178 = pneg %p177
    // Predicated region
    $region33: #{bisenet_output_forward.1} parent=5 // pred_check
      _
    $region34: #{bisenet_output_forward.1} parent=5 // pred_check_branch
      %180 = sbr.rel (%p177) target = $region36
    $region35: #{bisenet_output_forward.1} parent=5 // pred_region
      %s181 = ssub.s32 %s10, 1
      %p182 = scmp.lt.s32.totalorder %s19, 1
      %s183 = scalar_select %p182, %s19, 1
      %s184 = smul.addr %s183, 54
      %s185 = smul.addr %s184, 4
      %s186 = scalar_lea.vmem %s0, %s185
      %p187 = pneg %p48
      %p188 = pneg %p45
      %p189 = pneg %p69
      %p190 = pneg %p66
      %p191 = pneg %p90
      %p192 = pneg %p87
      %p193 = pneg %p111
      %p194 = pneg %p108
      %p195 = pneg %p139
      %p196 = pneg %p136
      %s197 = smul.u32 4, %s20
      %p198 = scmp.lt.s32.totalorder %s19, 1
      %s199 = scalar_select %p198, %s19, 1
      %p200 = scmp.lt.s32.totalorder %s197, 15
      %s201 = scalar_select %p200, %s197, 15
      %s202 = smul.addr %s201, 2
      %s203 = smul.addr %s199, 32
      %s204 = sadd.s32 %s202, %s203
      %s205 = smul.addr %s204, 4
      %s206 = scalar_lea.vmem %s4, %s205
      %p207 = scmp.lt.s32.totalorder %s19, 1
      %s208 = scalar_select %p207, %s19, 1
      %s209 = smul.addr %s208, 54
      %s210 = smul.addr %s209, 4
      %s211 = scalar_lea.vmem %s0, %s210
      %s212 = smul.u32 4, %s20
      %p213 = scmp.lt.s32.totalorder %s19, 1
      %s214 = scalar_select %p213, %s19, 1
      %p215 = scmp.lt.s32.totalorder %s212, 15
      %s216 = scalar_select %p215, %s212, 15
      %s217 = smul.addr %s216, 2
      %s218 = smul.addr %s214, 32
      %s219 = sadd.s32 %s217, %s218
      %s220 = smul.addr %s219, 4
      %s221 = scalar_lea.vmem %s4, %s220
      %s222 = smul.u32 4, %s20
      %s224 = smul.u32 %s20, 4
      %s225 = smul.u32 %s224, 3
      %s226 = smul.addr %s225, 4
      %s227 = scalar_lea.vmem %s211, %s226
      %v228 = vld [vmem:[%s227] sm:$0xf]
      %v229 = vld [vmem:[%s227 + $0x4] sm:$0xf]
      %v230 = vld [vmem:[%s227 + $0x8] sm:$0x1]
      %v231 = vld [vmem:[%s227 + $0xc] sm:$0xf]
      %v232 = vld [vmem:[%s227 + $0x10] sm:$0xf]
      %v233 = vld [vmem:[%s227 + $0x14] sm:$0x1]
      %v234 = vld [vmem:[%s227 + $0x18] sm:$0xf]
      %v235 = vld [vmem:[%s227 + $0x1c] sm:$0xf]
      %v236 = vld [vmem:[%s227 + $0x20] sm:$0x1]
      %v237 = vld [vmem:[%s227 + $0x24] sm:$0xf]
      %v238 = vld [vmem:[%s227 + $0x28] sm:$0xf]
      %v239 = vld [vmem:[%s227 + $0x2c] sm:$0x1]
      %v240 = vld [vmem:[%s227 + $0x30] sm:$0xf]
      %v241 = vld [vmem:[%s227 + $0x34] sm:$0xf]
      %v242 = vld [vmem:[%s227 + $0x38] sm:$0x1]
      %v243 = vld [vmem:[%s227 + $0x3c] sm:$0xf]
      %v244 = vld [vmem:[%s227 + $0x40] sm:$0xf]
      %v245 = vld [vmem:[%s227 + $0x44] sm:$0x1]
      %v254 = vunpack.c.l.b16 %v228
      %v255 = vunpack.c.l.b16 %v229
      %v256 = vunpack.c.l.b16 %v231
      %v257 = vunpack.c.l.b16 %v232
      %v258 = vunpack.c.l.b16 %v234
      %v259 = vunpack.c.l.b16 %v235
      %v260 = vunpack.c.l.b16 %v237
      %v261 = vunpack.c.l.b16 %v238
      %v262 = vpack.c.b16 %v255, %v254
      %v263 = vpack.c.b16 %v257, %v256
      %v264 = vpack.c.b16 %v259, %v258
      %v265 = vpack.c.b16 %v261, %v260
      %v270 = vunpack.c.l.b16 %v230
      %v271 = vunpack.c.l.b16 %v233
      %v272 = vunpack.c.l.b16 %v236
      %v273 = vunpack.c.l.b16 %v239
      %v274 = vpack.c.b16 %v270, %v270
      %v275 = vpack.c.b16 %v271, %v271
      %v276 = vpack.c.b16 %v272, %v272
      %v277 = vpack.c.b16 %v273, %v273
      %vm278 = vsmask.f32 7424
      %v280 = vshrl.u32 %v262, 16
      %v282 = vshll.u32 %v262, 16
      %v284 = vrot.slane %v282, 1
      %v285 = vor.u32 %v280, %v284
      %v287 = vshll.u32 %v274, 16
      %v289 = vrot.slane %v287, 1
      %v290 = vsel %vm278, %v285, %v289
      %v292 = vshrl.u32 %v263, 16
      %v294 = vshll.u32 %v263, 16
      %v296 = vrot.slane %v294, 1
      %v297 = vor.u32 %v292, %v296
      %v299 = vshll.u32 %v275, 16
      %v301 = vrot.slane %v299, 1
      %v302 = vsel %vm278, %v297, %v301
      %v304 = vshrl.u32 %v264, 16
      %v306 = vshll.u32 %v264, 16
      %v308 = vrot.slane %v306, 1
      %v309 = vor.u32 %v304, %v308
      %v311 = vshll.u32 %v276, 16
      %v313 = vrot.slane %v311, 1
      %v314 = vsel %vm278, %v309, %v313
      %v316 = vshrl.u32 %v265, 16
      %v318 = vshll.u32 %v265, 16
      %v320 = vrot.slane %v318, 1
      %v321 = vor.u32 %v316, %v320
      %v323 = vshll.u32 %v277, 16
      %v325 = vrot.slane %v323, 1
      %v326 = vsel %vm278, %v321, %v325
      %327 = vrot.lane.b32.xlu0 %v290, 64
      %v328 = vpop.permute.xlu0 %327
      %329 = vrot.lane.b32.xlu0 %v302, 64
      %v330 = vpop.permute.xlu0 %329
      %331 = vrot.lane.b32.xlu0 %v314, 64
      %v332 = vpop.permute.xlu0 %331
      %333 = vrot.lane.b32.xlu0 %v326, 64
      %v334 = vpop.permute.xlu0 %333
      %vm335 = vcmask 1046528
      %v336 = vrot.slane %v262, 1
      %v337 = vrot.slane %v274, 1
      %v338 = vsel %vm335, %v336, %v337
      %v339 = vrot.slane %v263, 1
      %v340 = vrot.slane %v275, 1
      %v341 = vsel %vm335, %v339, %v340
      %v342 = vrot.slane %v264, 1
      %v343 = vrot.slane %v276, 1
      %v344 = vsel %vm335, %v342, %v343
      %v345 = vrot.slane %v265, 1
      %v346 = vrot.slane %v277, 1
      %v347 = vsel %vm335, %v345, %v346
      %vm348 = vcmask 523264
      %v350 = vsel %vm348, %v262, %v328
      %v353 = vsel %vm348, %v263, %v330
      %v356 = vsel %vm348, %v264, %v332
      %v359 = vsel %vm348, %v265, %v334
      %v363 = vunpack.c.l.b16 %v240
      %v364 = vunpack.c.l.b16 %v241
      %v365 = vpack.c.b16 %v364, %v363
      %v367 = vunpack.c.l.b16 %v242
      %v368 = vpack.c.b16 %v367, %v367
      %v370 = vshrl.u32 %v365, 16
      %v372 = vshll.u32 %v365, 16
      %v374 = vrot.slane %v372, 1
      %v375 = vor.u32 %v370, %v374
      %v377 = vshll.u32 %v368, 16
      %v379 = vrot.slane %v377, 1
      %v380 = vsel %vm278, %v375, %v379
      %381 = vrot.lane.b32.xlu0 %v380, 64
      %v382 = vpop.permute.xlu0 %381
      %v383 = vrot.slane %v365, 1
      %v384 = vrot.slane %v368, 1
      %v385 = vsel %vm335, %v383, %v384
      %v387 = vsel %vm348, %v365, %v382
      %v391 = vunpack.c.l.b16 %v243
      %v392 = vunpack.c.l.b16 %v244
      %v393 = vpack.c.b16 %v392, %v391
      %v395 = vunpack.c.l.b16 %v245
      %v396 = vpack.c.b16 %v395, %v395
      %v398 = vshrl.u32 %v393, 16
      %v400 = vshll.u32 %v393, 16
      %v402 = vrot.slane %v400, 1
      %v403 = vor.u32 %v398, %v402
      %v405 = vshll.u32 %v396, 16
      %v407 = vrot.slane %v405, 1
      %v408 = vsel %vm278, %v403, %v407
      %409 = vrot.lane.b32.xlu0 %v408, 64
      %v410 = vpop.permute.xlu0 %409
      %v411 = vrot.slane %v393, 1
      %v412 = vrot.slane %v396, 1
      %v413 = vsel %vm335, %v411, %v412
      %v415 = vsel %vm348, %v393, %v410
      %v417 = vld [vmem:[%s1] sm:$0xf]
      %v418 = vld [vmem:[%s1 + $0x4] sm:$0xf]
      %v419 = vld [vmem:[%s1 + $0x8] sm:$0xf]
      %v420 = vld [vmem:[%s1 + $0xc] sm:$0xf]
      %v421 = vld [vmem:[%s1 + $0x10] sm:$0xf]
      %v422 = vld [vmem:[%s1 + $0x14] sm:$0xf]
      %v423 = vld [vmem:[%s1 + $0x18] sm:$0xf]
      %v424 = vld [vmem:[%s1 + $0x1c] sm:$0xf]
      %v425 = vld [vmem:[%s1 + $0x20] sm:$0xf]
      %v426 = vld [vmem:[%s1 + $0x24] sm:$0xf]
      %v427 = vld [vmem:[%s1 + $0x28] sm:$0xf]
      %v428 = vld [vmem:[%s1 + $0x2c] sm:$0xf]
      %v429 = vld [vmem:[%s1 + $0x30] sm:$0xf]
      %v430 = vld [vmem:[%s1 + $0x34] sm:$0xf]
      %v431 = vld [vmem:[%s1 + $0x38] sm:$0xf]
      %v432 = vld [vmem:[%s1 + $0x3c] sm:$0xf]
      %v433 = vld [vmem:[%s1 + $0x40] sm:$0xf]
      %v434 = vld [vmem:[%s1 + $0x44] sm:$0xf]
      %v435 = vld [vmem:[%s1 + $0x48] sm:$0xf]
      %v436 = vld [vmem:[%s1 + $0x4c] sm:$0xf]
      %v437 = vld [vmem:[%s1 + $0x50] sm:$0xf]
      %v438 = vld [vmem:[%s1 + $0x54] sm:$0xf]
      %v439 = vld [vmem:[%s1 + $0x58] sm:$0xf]
      %v440 = vld [vmem:[%s1 + $0x5c] sm:$0xf]
      %s441 = scalar_lea.vmem %s1, 96
      %v442 = vld [vmem:[%s441] sm:$0xf]
      %v443 = vld [vmem:[%s441 + $0x4] sm:$0xf]
      %v444 = vld [vmem:[%s441 + $0x8] sm:$0xf]
      %v445 = vld [vmem:[%s441 + $0xc] sm:$0xf]
      %v446 = vld [vmem:[%s441 + $0x10] sm:$0xf]
      %v447 = vld [vmem:[%s441 + $0x14] sm:$0xf]
      %v448 = vld [vmem:[%s441 + $0x18] sm:$0xf]
      %v449 = vld [vmem:[%s441 + $0x1c] sm:$0xf]
      %v450 = vld [vmem:[%s441 + $0x20] sm:$0xf]
      %v451 = vld [vmem:[%s441 + $0x24] sm:$0xf]
      %v452 = vld [vmem:[%s441 + $0x28] sm:$0xf]
      %v453 = vld [vmem:[%s441 + $0x2c] sm:$0xf]
      %v454 = vld [vmem:[%s441 + $0x30] sm:$0xf]
      %v455 = vld [vmem:[%s441 + $0x34] sm:$0xf]
      %v456 = vld [vmem:[%s441 + $0x38] sm:$0xf]
      %v457 = vld [vmem:[%s441 + $0x3c] sm:$0xf]
      %v458 = vld [vmem:[%s441 + $0x40] sm:$0xf]
      %v459 = vld [vmem:[%s441 + $0x44] sm:$0xf]
      %v460 = vld [vmem:[%s441 + $0x48] sm:$0xf]
      %v461 = vld [vmem:[%s441 + $0x4c] sm:$0xf]
      %v462 = vld [vmem:[%s441 + $0x50] sm:$0xf]
      %v463 = vld [vmem:[%s441 + $0x54] sm:$0xf]
      %v464 = vld [vmem:[%s441 + $0x58] sm:$0xf]
      %v465 = vld [vmem:[%s441 + $0x5c] sm:$0xf]
      %v490 = vunpack.c.l.b16 %v442
      %v491 = vunpack.c.l.b16 %v443
      %v492 = vunpack.c.l.b16 %v444
      %v493 = vunpack.c.l.b16 %v445
      %v494 = vunpack.c.l.b16 %v446
      %v495 = vunpack.c.l.b16 %v447
      %v496 = vunpack.c.l.b16 %v448
      %v497 = vunpack.c.l.b16 %v449
      %v498 = vunpack.c.l.b16 %v450
      %v499 = vunpack.c.l.b16 %v451
      %v500 = vunpack.c.l.b16 %v452
      %v501 = vunpack.c.l.b16 %v453
      %v502 = vunpack.c.l.b16 %v454
      %v503 = vunpack.c.l.b16 %v455
      %v504 = vunpack.c.l.b16 %v456
      %v505 = vunpack.c.l.b16 %v457
      %v506 = vunpack.c.l.b16 %v458
      %v507 = vunpack.c.l.b16 %v459
      %v508 = vunpack.c.l.b16 %v460
      %v509 = vunpack.c.l.b16 %v461
      %v510 = vunpack.c.l.b16 %v462
      %v511 = vunpack.c.l.b16 %v463
      %v512 = vunpack.c.l.b16 %v464
      %v513 = vunpack.c.l.b16 %v465
      %v514 = vpack.c.b16 %v491, %v490
      %v515 = vpack.c.b16 %v493, %v492
      %v516 = vpack.c.b16 %v495, %v494
      %v517 = vpack.c.b16 %v497, %v496
      %v518 = vpack.c.b16 %v499, %v498
      %v519 = vpack.c.b16 %v501, %v500
      %v520 = vpack.c.b16 %v503, %v502
      %v521 = vpack.c.b16 %v505, %v504
      %v522 = vpack.c.b16 %v507, %v506
      %v523 = vpack.c.b16 %v509, %v508
      %v524 = vpack.c.b16 %v511, %v510
      %v525 = vpack.c.b16 %v513, %v512
      %v539 = vsel %vm348, %v341, 0
      %v542 = vsel %vm348, %v344, 0
      %v545 = vsel %vm348, %v347, 0
      %v548 = vsel %vm348, %v385, 0
      %550 = vmatpush.bf16.msra.mxu0 %v521
      %551 = vmatpush.bf16.msra.mxu0 %v520
      %552 = vmatpush.bf16.msra.mxu0 %v519
      %553 = vmatpush.bf16.msra.mxu0 %v518
      %554 = vmatpush.bf16.msra.mxu0 %v517
      %555 = vmatpush.bf16.msra.mxu0 %v516
      %556 = vmatpush.bf16.msra.mxu0 %v515
      %557 = vmatpush.bf16.msra.mxu0 %v514
      %558 = vmatmul.bf16.gmra.mxu0 %v353
      %v559 = vpop.f32.mrf.mxu0
      %v560 = vadd.f32 0.0, %v559
      %v561 = vpop.f32.mrf.mxu0
      %v562 = vadd.f32 0.0, %v561
      %563 = vmatmul.bf16.gmra.mxu0 %v356
      %v564 = vpop.f32.mrf.mxu0
      %v565 = vadd.f32 0.0, %v564
      %v566 = vpop.f32.mrf.mxu0
      %v567 = vadd.f32 0.0, %v566
      %568 = vmatmul.bf16.gmra.mxu0 %v359
      %v569 = vpop.f32.mrf.mxu0
      %v570 = vadd.f32 0.0, %v569
      %v571 = vpop.f32.mrf.mxu0
      %v572 = vadd.f32 0.0, %v571
      %573 = vmatmul.bf16.gmra.mxu0 %v387
      %v574 = vpop.f32.mrf.mxu0
      %v575 = vadd.f32 0.0, %v574
      %v576 = vpop.f32.mrf.mxu0
      %v577 = vadd.f32 0.0, %v576
      %578 = vdwg.mxu0
      %579 = vmatpush.bf16.msra.mxu0 0
      %580 = vmatpush.bf16.msra.mxu0 0
      %581 = vmatpush.bf16.msra.mxu0 0
      %582 = vmatpush.bf16.msra.mxu0 0
      %583 = vmatpush.bf16.msra.mxu0 %v525
      %584 = vmatpush.bf16.msra.mxu0 %v524
      %585 = vmatpush.bf16.msra.mxu0 %v523
      %586 = vmatpush.bf16.msra.mxu0 %v522
      %587 = vmatmul.bf16.gmra.mxu0 %v539
      %v588 = vpop.f32.mrf.mxu0
      %v589 = vadd.f32 %v560, %v588
      %v590 = vpop.f32.mrf.mxu0
      %v591 = vadd.f32 %v562, %v590
      %592 = vmatmul.bf16.gmra.mxu0 %v542
      %v593 = vpop.f32.mrf.mxu0
      %v594 = vadd.f32 %v565, %v593
      %v595 = vpop.f32.mrf.mxu0
      %v596 = vadd.f32 %v567, %v595
      %597 = vmatmul.bf16.gmra.mxu0 %v545
      %v598 = vpop.f32.mrf.mxu0
      %v599 = vadd.f32 %v570, %v598
      %v600 = vpop.f32.mrf.mxu0
      %v601 = vadd.f32 %v572, %v600
      %602 = vmatmul.bf16.gmra.mxu0 %v548
      %v603 = vpop.f32.mrf.mxu0
      %v604 = vadd.f32 %v575, %v603
      %v605 = vpop.f32.mrf.mxu0
      %v606 = vadd.f32 %v577, %v605
      %607 = vdwg.mxu0
      %v632 = vunpack.c.l.b16 %v417
      %v633 = vunpack.c.l.b16 %v418
      %v634 = vunpack.c.l.b16 %v419
      %v635 = vunpack.c.l.b16 %v420
      %v636 = vunpack.c.l.b16 %v421
      %v637 = vunpack.c.l.b16 %v422
      %v638 = vunpack.c.l.b16 %v423
      %v639 = vunpack.c.l.b16 %v424
      %v640 = vunpack.c.l.b16 %v425
      %v641 = vunpack.c.l.b16 %v426
      %v642 = vunpack.c.l.b16 %v427
      %v643 = vunpack.c.l.b16 %v428
      %v644 = vunpack.c.l.b16 %v429
      %v645 = vunpack.c.l.b16 %v430
      %v646 = vunpack.c.l.b16 %v431
      %v647 = vunpack.c.l.b16 %v432
      %v648 = vunpack.c.l.b16 %v433
      %v649 = vunpack.c.l.b16 %v434
      %v650 = vunpack.c.l.b16 %v435
      %v651 = vunpack.c.l.b16 %v436
      %v652 = vunpack.c.l.b16 %v437
      %v653 = vunpack.c.l.b16 %v438
      %v654 = vunpack.c.l.b16 %v439
      %v655 = vunpack.c.l.b16 %v440
      %v656 = vpack.c.b16 %v633, %v632
      %v657 = vpack.c.b16 %v635, %v634
      %v658 = vpack.c.b16 %v637, %v636
      %v659 = vpack.c.b16 %v639, %v638
      %v660 = vpack.c.b16 %v641, %v640
      %v661 = vpack.c.b16 %v643, %v642
      %v662 = vpack.c.b16 %v645, %v644
      %v663 = vpack.c.b16 %v647, %v646
      %v664 = vpack.c.b16 %v649, %v648
      %v665 = vpack.c.b16 %v651, %v650
      %v666 = vpack.c.b16 %v653, %v652
      %v667 = vpack.c.b16 %v655, %v654
      %v681 = vsel %vm348, %v338, 0
      %683 = vmatpush.bf16.msra.mxu0 %v663
      %684 = vmatpush.bf16.msra.mxu0 %v662
      %685 = vmatpush.bf16.msra.mxu0 %v661
      %686 = vmatpush.bf16.msra.mxu0 %v660
      %687 = vmatpush.bf16.msra.mxu0 %v659
      %688 = vmatpush.bf16.msra.mxu0 %v658
      %689 = vmatpush.bf16.msra.mxu0 %v657
      %690 = vmatpush.bf16.msra.mxu0 %v656
      %691 = vmatmul.bf16.gmra.mxu0 %v350
      %v692 = vpop.f32.mrf.mxu0
      %v693 = vadd.f32 %v589, %v692
      %v694 = vpop.f32.mrf.mxu0
      %v695 = vadd.f32 %v591, %v694
      %696 = vmatmul.bf16.gmra.mxu0 %v353
      %v697 = vpop.f32.mrf.mxu0
      %v698 = vadd.f32 %v594, %v697
      %v699 = vpop.f32.mrf.mxu0
      %v700 = vadd.f32 %v596, %v699
      %701 = vmatmul.bf16.gmra.mxu0 %v356
      %v702 = vpop.f32.mrf.mxu0
      %v703 = vadd.f32 %v599, %v702
      %v704 = vpop.f32.mrf.mxu0
      %v705 = vadd.f32 %v601, %v704
      %706 = vmatmul.bf16.gmra.mxu0 %v359
      %v707 = vpop.f32.mrf.mxu0
      %v708 = vadd.f32 %v604, %v707
      %v709 = vpop.f32.mrf.mxu0
      %v710 = vadd.f32 %v606, %v709
      %711 = vdwg.mxu0
      %712 = vmatpush.bf16.msra.mxu0 0
      %713 = vmatpush.bf16.msra.mxu0 0
      %714 = vmatpush.bf16.msra.mxu0 0
      %715 = vmatpush.bf16.msra.mxu0 0
      %716 = vmatpush.bf16.msra.mxu0 %v667
      %717 = vmatpush.bf16.msra.mxu0 %v666
      %718 = vmatpush.bf16.msra.mxu0 %v665
      %719 = vmatpush.bf16.msra.mxu0 %v664
      %720 = vmatmul.bf16.gmra.mxu0 %v681
      %v721 = vpop.f32.mrf.mxu0
      %v722 = vadd.f32 %v693, %v721
      %v723 = vpop.f32.mrf.mxu0
      %v724 = vadd.f32 %v695, %v723
      %725 = vmatmul.bf16.gmra.mxu0 %v539
      %v726 = vpop.f32.mrf.mxu0
      %v727 = vadd.f32 %v698, %v726
      %v728 = vpop.f32.mrf.mxu0
      %v729 = vadd.f32 %v700, %v728
      %730 = vmatmul.bf16.gmra.mxu0 %v542
      %v731 = vpop.f32.mrf.mxu0
      %v732 = vadd.f32 %v703, %v731
      %v733 = vpop.f32.mrf.mxu0
      %v734 = vadd.f32 %v705, %v733
      %735 = vmatmul.bf16.gmra.mxu0 %v545
      %v736 = vpop.f32.mrf.mxu0
      %v737 = vadd.f32 %v708, %v736
      %v738 = vpop.f32.mrf.mxu0
      %v739 = vadd.f32 %v710, %v738
      %740 = vdwg.mxu0
      %s741 = scalar_lea.vmem %s1, 192
      %v742 = vld [vmem:[%s741] sm:$0xf]
      %v743 = vld [vmem:[%s741 + $0x4] sm:$0xf]
      %v744 = vld [vmem:[%s741 + $0x8] sm:$0xf]
      %v745 = vld [vmem:[%s741 + $0xc] sm:$0xf]
      %v746 = vld [vmem:[%s741 + $0x10] sm:$0xf]
      %v747 = vld [vmem:[%s741 + $0x14] sm:$0xf]
      %v748 = vld [vmem:[%s741 + $0x18] sm:$0xf]
      %v749 = vld [vmem:[%s741 + $0x1c] sm:$0xf]
      %v750 = vld [vmem:[%s741 + $0x20] sm:$0xf]
      %v751 = vld [vmem:[%s741 + $0x24] sm:$0xf]
      %v752 = vld [vmem:[%s741 + $0x28] sm:$0xf]
      %v753 = vld [vmem:[%s741 + $0x2c] sm:$0xf]
      %v754 = vld [vmem:[%s741 + $0x30] sm:$0xf]
      %v755 = vld [vmem:[%s741 + $0x34] sm:$0xf]
      %v756 = vld [vmem:[%s741 + $0x38] sm:$0xf]
      %v757 = vld [vmem:[%s741 + $0x3c] sm:$0xf]
      %v758 = vld [vmem:[%s741 + $0x40] sm:$0xf]
      %v759 = vld [vmem:[%s741 + $0x44] sm:$0xf]
      %v760 = vld [vmem:[%s741 + $0x48] sm:$0xf]
      %v761 = vld [vmem:[%s741 + $0x4c] sm:$0xf]
      %v762 = vld [vmem:[%s741 + $0x50] sm:$0xf]
      %v763 = vld [vmem:[%s741 + $0x54] sm:$0xf]
      %v764 = vld [vmem:[%s741 + $0x58] sm:$0xf]
      %v765 = vld [vmem:[%s741 + $0x5c] sm:$0xf]
      %v790 = vunpack.c.l.b16 %v742
      %v791 = vunpack.c.l.b16 %v743
      %v792 = vunpack.c.l.b16 %v744
      %v793 = vunpack.c.l.b16 %v745
      %v794 = vunpack.c.l.b16 %v746
      %v795 = vunpack.c.l.b16 %v747
      %v796 = vunpack.c.l.b16 %v748
      %v797 = vunpack.c.l.b16 %v749
      %v798 = vunpack.c.l.b16 %v750
      %v799 = vunpack.c.l.b16 %v751
      %v800 = vunpack.c.l.b16 %v752
      %v801 = vunpack.c.l.b16 %v753
      %v802 = vunpack.c.l.b16 %v754
      %v803 = vunpack.c.l.b16 %v755
      %v804 = vunpack.c.l.b16 %v756
      %v805 = vunpack.c.l.b16 %v757
      %v806 = vunpack.c.l.b16 %v758
      %v807 = vunpack.c.l.b16 %v759
      %v808 = vunpack.c.l.b16 %v760
      %v809 = vunpack.c.l.b16 %v761
      %v810 = vunpack.c.l.b16 %v762
      %v811 = vunpack.c.l.b16 %v763
      %v812 = vunpack.c.l.b16 %v764
      %v813 = vunpack.c.l.b16 %v765
      %v814 = vpack.c.b16 %v791, %v790
      %v815 = vpack.c.b16 %v793, %v792
      %v816 = vpack.c.b16 %v795, %v794
      %v817 = vpack.c.b16 %v797, %v796
      %v818 = vpack.c.b16 %v799, %v798
      %v819 = vpack.c.b16 %v801, %v800
      %v820 = vpack.c.b16 %v803, %v802
      %v821 = vpack.c.b16 %v805, %v804
      %v822 = vpack.c.b16 %v807, %v806
      %v823 = vpack.c.b16 %v809, %v808
      %v824 = vpack.c.b16 %v811, %v810
      %v825 = vpack.c.b16 %v813, %v812
      %v839 = vsel %vm348, %v413, 0
      %841 = vmatpush.bf16.msra.mxu0 %v821
      %842 = vmatpush.bf16.msra.mxu0 %v820
      %843 = vmatpush.bf16.msra.mxu0 %v819
      %844 = vmatpush.bf16.msra.mxu0 %v818
      %845 = vmatpush.bf16.msra.mxu0 %v817
      %846 = vmatpush.bf16.msra.mxu0 %v816
      %847 = vmatpush.bf16.msra.mxu0 %v815
      %848 = vmatpush.bf16.msra.mxu0 %v814
      %849 = vmatmul.bf16.gmra.mxu0 %v356
      %v850 = vpop.f32.mrf.mxu0
      %v851 = vadd.f32 0.0, %v850
      %v852 = vpop.f32.mrf.mxu0
      %v853 = vadd.f32 0.0, %v852
      %854 = vmatmul.bf16.gmra.mxu0 %v359
      %v855 = vpop.f32.mrf.mxu0
      %v856 = vadd.f32 0.0, %v855
      %v857 = vpop.f32.mrf.mxu0
      %v858 = vadd.f32 0.0, %v857
      %859 = vmatmul.bf16.gmra.mxu0 %v387
      %v860 = vpop.f32.mrf.mxu0
      %v861 = vadd.f32 0.0, %v860
      %v862 = vpop.f32.mrf.mxu0
      %v863 = vadd.f32 0.0, %v862
      %864 = vmatmul.bf16.gmra.mxu0 %v415
      %v865 = vpop.f32.mrf.mxu0
      %v866 = vadd.f32 0.0, %v865
      %v867 = vpop.f32.mrf.mxu0
      %v868 = vadd.f32 0.0, %v867
      %869 = vdwg.mxu0
      %870 = vmatpush.bf16.msra.mxu0 0
      %871 = vmatpush.bf16.msra.mxu0 0
      %872 = vmatpush.bf16.msra.mxu0 0
      %873 = vmatpush.bf16.msra.mxu0 0
      %874 = vmatpush.bf16.msra.mxu0 %v825
      %875 = vmatpush.bf16.msra.mxu0 %v824
      %876 = vmatpush.bf16.msra.mxu0 %v823
      %877 = vmatpush.bf16.msra.mxu0 %v822
      %878 = vmatmul.bf16.gmra.mxu0 %v542
      %v879 = vpop.f32.mrf.mxu0
      %v880 = vadd.f32 %v851, %v879
      %v881 = vpop.f32.mrf.mxu0
      %v882 = vadd.f32 %v853, %v881
      %883 = vmatmul.bf16.gmra.mxu0 %v545
      %v884 = vpop.f32.mrf.mxu0
      %v885 = vadd.f32 %v856, %v884
      %v886 = vpop.f32.mrf.mxu0
      %v887 = vadd.f32 %v858, %v886
      %888 = vmatmul.bf16.gmra.mxu0 %v548
      %v889 = vpop.f32.mrf.mxu0
      %v890 = vadd.f32 %v861, %v889
      %v891 = vpop.f32.mrf.mxu0
      %v892 = vadd.f32 %v863, %v891
      %893 = vmatmul.bf16.gmra.mxu0 %v839
      %v894 = vpop.f32.mrf.mxu0
      %v895 = vadd.f32 %v866, %v894
      %v896 = vpop.f32.mrf.mxu0
      %v897 = vadd.f32 %v868, %v896
      %898 = vdwg.mxu0
      %v899 = vadd.f32 %v722, %v880
      %v900 = vadd.f32 %v724, %v882
      %v901 = vadd.f32 %v727, %v885
      %v902 = vadd.f32 %v729, %v887
      %v903 = vadd.f32 %v732, %v890
      %v904 = vadd.f32 %v734, %v892
      %v905 = vadd.f32 %v737, %v895
      %v906 = vadd.f32 %v739, %v897
      %v907 = vld [vmem:[%s2] sm:$0x1]
      %v909 = vperm.slane %v907, 0
      %v911 = vadd.f32 %v899, %v909
      %v912 = vadd.f32 %v900, %v909
      %v913 = vadd.f32 %v901, %v909
      %v914 = vadd.f32 %v902, %v909
      %v915 = vadd.f32 %v903, %v909
      %v916 = vadd.f32 %v904, %v909
      %v917 = vadd.f32 %v905, %v909
      %v918 = vadd.f32 %v906, %v909
      %v919 = vmax.f32 %v911, 0.0
      %v920 = vmax.f32 %v912, 0.0
      %v921 = vmax.f32 %v913, 0.0
      %v922 = vmax.f32 %v914, 0.0
      %v923 = vmax.f32 %v915, 0.0
      %v924 = vmax.f32 %v916, 0.0
      %v925 = vmax.f32 %v917, 0.0
      %v926 = vmax.f32 %v918, 0.0
      %v927 = vpack.c.bf16 %v920, %v919
      %v928 = vpack.c.bf16 %v922, %v921
      %v929 = vpack.c.bf16 %v924, %v923
      %v930 = vpack.c.bf16 %v926, %v925
      %v931 = vld [vmem:[%s3] sm:$0xf]
      %v932 = vld [vmem:[%s3 + $0x4] sm:$0xf]
      %v933 = vld [vmem:[%s3 + $0x8] sm:$0xf]
      %v934 = vld [vmem:[%s3 + $0xc] sm:$0xf]
      %v935 = vld [vmem:[%s3 + $0x10] sm:$0xf]
      %v936 = vld [vmem:[%s3 + $0x14] sm:$0xf]
      %v937 = vld [vmem:[%s3 + $0x18] sm:$0xf]
      %v938 = vld [vmem:[%s3 + $0x1c] sm:$0xf]
      %v939 = vld [vmem:[%s3 + $0x20] sm:$0xf]
      %v940 = vld [vmem:[%s3 + $0x24] sm:$0xf]
      %v941 = vld [vmem:[%s3 + $0x28] sm:$0xf]
      %v942 = vld [vmem:[%s3 + $0x2c] sm:$0xf]
      %v943 = vld [vmem:[%s3 + $0x30] sm:$0xf]
      %v944 = vld [vmem:[%s3 + $0x34] sm:$0xf]
      %v945 = vld [vmem:[%s3 + $0x38] sm:$0xf]
      %v946 = vld [vmem:[%s3 + $0x3c] sm:$0xf]
      %v963 = vunpack.c.l.b16 %v931
      %v964 = vunpack.c.l.b16 %v932
      %v965 = vunpack.c.l.b16 %v933
      %v966 = vunpack.c.l.b16 %v934
      %v967 = vunpack.c.l.b16 %v935
      %v968 = vunpack.c.l.b16 %v936
      %v969 = vunpack.c.l.b16 %v937
      %v970 = vunpack.c.l.b16 %v938
      %v971 = vunpack.c.l.b16 %v939
      %v972 = vunpack.c.l.b16 %v940
      %v973 = vunpack.c.l.b16 %v941
      %v974 = vunpack.c.l.b16 %v942
      %v975 = vunpack.c.l.b16 %v943
      %v976 = vunpack.c.l.b16 %v944
      %v977 = vunpack.c.l.b16 %v945
      %v978 = vunpack.c.l.b16 %v946
      %v979 = vpack.c.b16 %v964, %v963
      %v980 = vpack.c.b16 %v966, %v965
      %v981 = vpack.c.b16 %v968, %v967
      %v982 = vpack.c.b16 %v970, %v969
      %v983 = vpack.c.b16 %v972, %v971
      %v984 = vpack.c.b16 %v974, %v973
      %v985 = vpack.c.b16 %v976, %v975
      %v986 = vpack.c.b16 %v978, %v977
      %995 = vmatpush.bf16.msra.mxu0 %v986
      %996 = vmatpush.bf16.msra.mxu0 %v985
      %997 = vmatpush.bf16.msra.mxu0 %v984
      %998 = vmatpush.bf16.msra.mxu0 %v983
      %999 = vmatpush.bf16.msra.mxu0 %v982
      %1000 = vmatpush.bf16.msra.mxu0 %v981
      %1001 = vmatpush.bf16.msra.mxu0 %v980
      %1002 = vmatpush.bf16.msra.mxu0 %v979
      %1003 = vmatmul.bf16.gmra.mxu0 %v927
      %v1004 = vpop.f32.mrf.mxu0
      %v1005 = vadd.f32 0.0, %v1004
      %v1006 = vpop.f32.mrf.mxu0
      %v1007 = vadd.f32 0.0, %v1006
      %1008 = vmatmul.bf16.gmra.mxu0 %v928
      %v1009 = vpop.f32.mrf.mxu0
      %v1010 = vadd.f32 0.0, %v1009
      %v1011 = vpop.f32.mrf.mxu0
      %v1012 = vadd.f32 0.0, %v1011
      %1013 = vmatmul.bf16.gmra.mxu0 %v929
      %v1014 = vpop.f32.mrf.mxu0
      %v1015 = vadd.f32 0.0, %v1014
      %v1016 = vpop.f32.mrf.mxu0
      %v1017 = vadd.f32 0.0, %v1016
      %1018 = vmatmul.bf16.gmra.mxu0 %v930
      %v1019 = vpop.f32.mrf.mxu0
      %v1020 = vadd.f32 0.0, %v1019
      %v1021 = vpop.f32.mrf.mxu0
      %v1022 = vadd.f32 0.0, %v1021
      %1023 = vdwg.mxu0
      %v1024 = vpack.c.bf16 %v1005, %v1005
      %v1025 = vpack.c.bf16 %v1007, %v1007
      %v1026 = vpack.c.bf16 %v1010, %v1010
      %v1027 = vpack.c.bf16 %v1012, %v1012
      %v1028 = vpack.c.bf16 %v1015, %v1015
      %v1029 = vpack.c.bf16 %v1017, %v1017
      %v1030 = vpack.c.bf16 %v1020, %v1020
      %v1031 = vpack.c.bf16 %v1022, %v1022
      %1032 = vst [vmem:[%s221] sm:$0xf] %v1024
      %1033 = vst [vmem:[%s221 + $0x4] sm:$0xf] %v1025
      %1034 = vst [vmem:[%s221 + $0x8] sm:$0xf] %v1026
      %1035 = vst [vmem:[%s221 + $0xc] sm:$0xf] %v1027
      %1036 = vst [vmem:[%s221 + $0x10] sm:$0xf] %v1028
      %1037 = vst [vmem:[%s221 + $0x14] sm:$0xf] %v1029
      %1038 = vst [vmem:[%s221 + $0x18] sm:$0xf] %v1030
      %1039 = vst [vmem:[%s221 + $0x1c] sm:$0xf] %v1031
      %s1040 = smul.u32 4, %s20
      %p1041 = scmp.lt.s32.totalorder %s19, 1
      %s1042 = scalar_select %p1041, %s19, 1
      %p1043 = scmp.lt.s32.totalorder %s1040, 15
      %s1044 = scalar_select %p1043, %s1040, 15
      %s1045 = smul.addr %s1044, 2
      %s1046 = smul.addr %s1042, 32
      %s1047 = sadd.s32 %s1045, %s1046
      %s1048 = smul.addr %s1047, 4
      %s1049 = scalar_lea.vmem %s4, %s1048
      // Predicated region
      $region37: #{bisenet_output_forward.1} parent=35 // pred_check
        %p1050 = pneg %p136
      $region38: #{bisenet_output_forward.1} parent=35 // pred_check_branch
        %1052 = sbr.rel (%p1050) target = $region40
      $region39: #{bisenet_output_forward.1} parent=35 // pred_region
        %s1053 = smul.u32 4, %s20
      $region40: #{bisenet_output_forward.1} parent=35 // pred_fallthru
        _
    $region36: #{bisenet_output_forward.1} parent=5 // pred_fallthru
      _
    %p1054 = scmp.le.s32.totalorder 2, %s10
    // Predicated region
    $region41: #{bisenet_output_forward.1} parent=5 // pred_check
      %p1055 = pneg %p1054
    $region42: #{bisenet_output_forward.1} parent=5 // pred_check_branch
      %1057 = sbr.rel (%p1055) target = $region44
    $region43: #{bisenet_output_forward.1} parent=5 // pred_region
      %s1058 = ssub.s32 %s10, 2
      // Predicated region
      $region45: #{bisenet_output_forward.1} parent=43 // pred_check
        %p1059 = pneg %p142
      $region46: #{bisenet_output_forward.1} parent=43 // pred_check_branch
        %1061 = sbr.rel (%p1059) target = $region48
      $region47: #{bisenet_output_forward.1} parent=43 // pred_region
        %s1062 = smul.u32 4, %s22
        %p1063 = scmp.lt.s32.totalorder %s21, 1
        %s1064 = scalar_select %p1063, %s21, 1
        %p1065 = scmp.lt.s32.totalorder %s1062, 15
        %s1066 = scalar_select %p1065, %s1062, 15
        %s1067 = smul.addr %s1066, 2
        %s1068 = smul.addr %s1064, 32
        %s1069 = sadd.s32 %s1067, %s1068
        %s1070 = smul.addr %s1069, 4
        %s1071 = scalar_lea.vmem %s4, %s1070
      $region48: #{bisenet_output_forward.1} parent=43 // pred_fallthru
        _
    $region44: #{bisenet_output_forward.1} parent=5 // pred_fallthru
      _
  $region6: #{bisenet_output_forward.1} parent=0 // loop_footer
    %s14 = sadd.s32 1, %s10
  $region7: #{bisenet_output_forward.1} parent=0 // loop_footer_branch
    %9 = sbr.rel target = $region3
  $region8: #{bisenet_output_forward.1} parent=0 // loop_exit
    _

</llo_original>
